<compile_context>
chip_gen: v5e
topology: v5e:2x2
jax: 0.10.0
libtpu: 0.0.40
codegen_flags: <defaults>
</compile_context>

<pallas_src>
import functools

import numpy as np
import jax
import jax.numpy as jnp
from jax import lax
from jax.experimental import pallas as pl
from jax.experimental.pallas import tpu as pltpu


# Lane-axis tile (multiple of 128).  512 keeps the per-block working set of the
# loss kernel around ~2 MB (double-buffered) even at real YOLOv4 sizes
# (n_ch=85, S=5776), which is safe on v5e's 16 MiB scoped VMEM and leaves
# plenty of headroom on v7x's 64 MiB total VMEM, while sitting near the
# measured ~85% HBM-roofline tiling point.
_LANE_TILE = 512


def _round_up(x, m):
    return ((x + m - 1) // m) * m


def _sigmoid(x):
    # exp goes to the EUP; the divide is cheap filler in a memory-bound kernel.
    return 1.0 / (1.0 + jnp.exp(-x))


# ----------------------------- Pallas kernels -----------------------------

def _decode_kernel(x_ref, g_ref, pred_ref, *, anchors):
    # x_ref / pred_ref: (B, A, Cb, TS)  (Cb = min(8, n_ch) channels of the head)
    # g_ref:            (2, TS)  row 0 = grid_x, row 1 = grid_y
    x = x_ref[...]
    g = g_ref[...]
    gx = g[0:1, :]                      # (1, TS) -> broadcasts over (B, A, Cb, TS)
    gy = g[1:2, :]

    a_idx = lax.broadcasted_iota(jnp.int32, x.shape, 1)
    aw = jnp.float32(anchors[-1][0])
    ah = jnp.float32(anchors[-1][1])
    for a in range(len(anchors) - 1):
        aw = jnp.where(a_idx == a, jnp.float32(anchors[a][0]), aw)
        ah = jnp.where(a_idx == a, jnp.float32(anchors[a][1]), ah)

    sig = _sigmoid(x)
    ex = jnp.exp(x)
    ch = lax.broadcasted_iota(jnp.int32, x.shape, 2)
    # channels >= 4 of pred are junk and are sliced away by the caller
    pred_ref[...] = jnp.where(ch == 0, sig + gx,
                    jnp.where(ch == 1, sig + gy,
                    jnp.where(ch == 2, ex * aw, ex * ah)))


def _loss_kernel(x_ref, t_ref, obj_ref, tmask_ref, tscale_ref, loss_ref):
    # x_ref, t_ref:                    (B, A, C, TS)   raw head output / target
    # obj_ref, tmask_ref, tscale_ref:  (B, A, 1, TS)
    # loss_ref:                        (1, 8, 128)     per-tile partial sums:
    #   row 0 = xy, 1 = wh, 2 = obj, 3 = cls, 4 = l2 (lane-broadcast)
    x = x_ref[...]
    t = t_ref[...]
    obj = obj_ref[...]
    tmask = tmask_ref[...]
    tscale = tscale_ref[...]

    ch = lax.broadcasted_iota(jnp.int32, x.shape, 2)
    is01 = ch < 2
    is23 = (ch == 2) | (ch == 3)
    is4 = ch == 4

    # channel-selective sigmoid fused here (no sigmoided HBM round trip)
    o = jnp.where(is23, x, _sigmoid(x))
    mask = jnp.where(is4, obj, tmask)      # obj_mask on ch 4, tgt_mask elsewhere
    scale = jnp.where(is23, tscale, 1.0)   # tgt_scale only on ch 2,3
    o = o * mask * scale
    t = t * mask * scale

    # PyTorch binary_cross_entropy clamps log terms at -100
    log_o = jnp.maximum(jnp.log(o), -100.0)
    log_1o = jnp.maximum(jnp.log(1.0 - o), -100.0)
    bce = -(t * log_o + (1.0 - t) * log_1o)
    sq = (o - t) * (o - t)

    # Single lane-axis reduction pass; per-channel selection then happens on
    # tiny (B, A, C, 1) partials.  NOTE: the bce rows for channels 2,3 may be
    # NaN (o is unbounded there); those rows are only ever *selected out*
    # below, never multiplied in, matching the reference semantics.
    bce_w = bce * jnp.where(is01, tscale * tscale, 1.0)
    bce_row = jnp.sum(bce_w, axis=3, keepdims=True)    # (B, A, C, 1)
    sq_row = jnp.sum(sq, axis=3, keepdims=True)        # (B, A, C, 1)

    chr_ = lax.broadcasted_iota(jnp.int32, bce_row.shape, 2)
    zero = jnp.zeros_like(bce_row)
    loss_xy = jnp.sum(jnp.where(chr_ < 2, bce_row, zero))
    loss_wh = 0.5 * jnp.sum(jnp.where((chr_ == 2) | (chr_ == 3), sq_row, zero))
    loss_obj = jnp.sum(jnp.where(chr_ == 4, bce_row, zero))
    loss_cls = jnp.sum(jnp.where(chr_ >= 5, bce_row, zero))
    loss_l2 = jnp.sum(sq_row)

    row = lax.broadcasted_iota(jnp.int32, loss_ref.shape, 1)
    loss_ref[...] = jnp.where(row == 0, loss_xy,
                    jnp.where(row == 1, loss_wh,
                    jnp.where(row == 2, loss_obj,
                    jnp.where(row == 3, loss_cls,
                    jnp.where(row == 4, loss_l2, 0.0)))))


# ----------------------------- kernel wrappers -----------------------------

@functools.partial(jax.jit, static_argnames=("anchors", "lane_tile"))
def _decode_head(x, grid_xy, *, anchors, lane_tile):
    B, A, C, Sp = x.shape
    cb = 8 if C >= 8 else C
    kernel = functools.partial(_decode_kernel, anchors=anchors)
    return pl.pallas_call(
        kernel,
        grid=(Sp // lane_tile,),
        in_specs=[
            pl.BlockSpec((B, A, cb, lane_tile), lambda s: (0, 0, 0, s)),
            pl.BlockSpec((2, lane_tile), lambda s: (0, s)),
        ],
        out_specs=pl.BlockSpec((B, A, cb, lane_tile), lambda s: (0, 0, 0, s)),
        out_shape=jax.ShapeDtypeStruct((B, A, cb, Sp), jnp.float32),
        compiler_params=pltpu.CompilerParams(dimension_semantics=("parallel",)),
    )(x, grid_xy)


@functools.partial(jax.jit, static_argnames=("lane_tile",))
def _head_losses(x, target, obj_mask, tgt_mask, tgt_scale, *, lane_tile):
    B, A, C, Sp = x.shape
    num_tiles = Sp // lane_tile
    big = pl.BlockSpec((B, A, C, lane_tile), lambda s: (0, 0, 0, s))
    small = pl.BlockSpec((B, A, 1, lane_tile), lambda s: (0, 0, 0, s))
    partials = pl.pallas_call(
        _loss_kernel,
        grid=(num_tiles,),
        in_specs=[big, big, small, small, small],
        out_specs=pl.BlockSpec((1, 8, 128), lambda s: (s, 0, 0)),
        out_shape=jax.ShapeDtypeStruct((num_tiles, 8, 128), jnp.float32),
        compiler_params=pltpu.CompilerParams(dimension_semantics=("parallel",)),
    )(x, target, obj_mask, tgt_mask, tgt_scale)
    sums = jnp.sum(partials[:, :, 0], axis=0)   # (8,) tile-partials summed by XLA
    return sums[0], sums[1], sums[2], sums[3], sums[4]


# ----------------------------- host-side glue -----------------------------

def bboxes_iou_np(a, b, xyxy=True):
    if a.shape[1] != 4 or b.shape[1] != 4:
        raise IndexError
    if xyxy:
        tl = np.maximum(a[:, None, :2], b[:, :2])
        br = np.minimum(a[:, None, 2:], b[:, 2:])
        area_a = np.prod(a[:, 2:] - a[:, :2], 1)
        area_b = np.prod(b[:, 2:] - b[:, :2], 1)
    else:
        tl = np.maximum(a[:, None, :2] - a[:, None, 2:] / 2, b[:, :2] - b[:, 2:] / 2)
        br = np.minimum(a[:, None, :2] + a[:, None, 2:] / 2, b[:, :2] + b[:, 2:] / 2)
        area_a = np.prod(a[:, 2:], 1)
        area_b = np.prod(b[:, 2:], 1)
    en = (tl < br).astype(a.dtype).prod(axis=2)
    area_i = np.prod(br - tl, 2) * en
    return area_i / (area_a[:, None] + area_b - area_i)


class YoloLossPallas:
    def __init__(self, n_classes=80, n_anchors=3, batch=2, image_size=608):
        self.strides = [8, 16, 32]
        self.n_classes = n_classes
        self.n_anchors = n_anchors
        self.anchors = [[12, 16], [19, 36], [40, 28], [36, 75], [76, 55],
                        [72, 146], [142, 110], [192, 243], [459, 401]]
        self.anch_masks = [[0, 1, 2], [3, 4, 5], [6, 7, 8]]
        self.ignore_thre = 0.5
        self.batch = batch
        self.image_size = image_size
        self._grid_cache = {}

        self.masked_anchors, self.ref_anchors = [], []
        for i in range(3):
            all_anchors_grid = [(w / self.strides[i], h / self.strides[i])
                                for w, h in self.anchors]
            masked = np.array([all_anchors_grid[j] for j in self.anch_masks[i]],
                              dtype=np.float32)
            ref = np.zeros((len(all_anchors_grid), 4), dtype=np.float32)
            ref[:, 2:] = np.array(all_anchors_grid, dtype=np.float32)
            self.masked_anchors.append(masked)
            self.ref_anchors.append(ref)

    def _grid_xy(self, fsize, Sp):
        key = (fsize, Sp)
        if key not in self._grid_cache:
            S = fsize * fsize
            g = np.zeros((2, Sp), dtype=np.float32)
            s = np.arange(S)
            g[0, :S] = (s % fsize).astype(np.float32)
            g[1, :S] = (s // fsize).astype(np.float32)
            self._grid_cache[key] = jnp.asarray(g)
        return self._grid_cache[key]

    def build_target(self, pred, labels, batchsize, fsize, n_ch, output_id):
        # pred: numpy (B, A, f, f, 4); labels: numpy (B, L, 5)
        # TODO(synk): per-label anchor matching / IoU argmax / scatter is data
        # dependent and stays host-side numpy (as in the PyTorch reference).
        A = self.n_anchors
        tgt_mask = np.zeros((batchsize, A, fsize, fsize, 4 + self.n_classes), np.float32)
        obj_mask = np.ones((batchsize, A, fsize, fsize), np.float32)
        tgt_scale = np.zeros((batchsize, A, fsize, fsize, 2), np.float32)
        target = np.zeros((batchsize, A, fsize, fsize, n_ch), np.float32)

        nlabel = (labels.sum(axis=2) > 0).sum(axis=1)
        stride = self.strides[output_id]
        truth_x_all = (labels[:, :, 2] + labels[:, :, 0]) / (stride * 2)
        truth_y_all = (labels[:, :, 3] + labels[:, :, 1]) / (stride * 2)
        truth_w_all = (labels[:, :, 2] - labels[:, :, 0]) / stride
        truth_h_all = (labels[:, :, 3] - labels[:, :, 1]) / stride
        truth_i_all = truth_x_all.astype(np.int16)   # cell index (trunc, as in repo)
        truth_j_all = truth_y_all.astype(np.int16)

        for b in range(batchsize):
            n = int(nlabel[b])
            if n == 0:
                continue
            truth_box = np.zeros((n, 4), np.float32)
            truth_box[:, 2] = truth_w_all[b, :n]
            truth_box[:, 3] = truth_h_all[b, :n]
            truth_i = truth_i_all[b, :n]
            truth_j = truth_j_all[b, :n]

            anchor_ious_all = bboxes_iou_np(truth_box, self.ref_anchors[output_id], xyxy=True)
            best_n_all = anchor_ious_all.argmax(axis=1)
            best_n = best_n_all % 3
            best_n_mask = ((best_n_all == self.anch_masks[output_id][0]) |
                           (best_n_all == self.anch_masks[output_id][1]) |
                           (best_n_all == self.anch_masks[output_id][2]))
            if best_n_mask.sum() == 0:
                continue

            truth_box[:, 0] = truth_x_all[b, :n]
            truth_box[:, 1] = truth_y_all[b, :n]
            pred_ious = bboxes_iou_np(pred[b].reshape(-1, 4), truth_box, xyxy=False)
            pred_best_iou = pred_ious.max(axis=1)
            pred_best_iou = (pred_best_iou > self.ignore_thre)
            pred_best_iou = pred_best_iou.reshape(pred[b].shape[:3])
            obj_mask[b] = (~pred_best_iou).astype(np.float32)

            for ti in range(best_n.shape[0]):
                if best_n_mask[ti]:
                    i, j = int(truth_i[ti]), int(truth_j[ti])
                    a = int(best_n[ti])
                    obj_mask[b, a, j, i] = 1
                    tgt_mask[b, a, j, i, :] = 1
                    target[b, a, j, i, 0] = truth_x_all[b, ti] - np.int16(truth_x_all[b, ti])
                    target[b, a, j, i, 1] = truth_y_all[b, ti] - np.int16(truth_y_all[b, ti])
                    target[b, a, j, i, 2] = np.log(
                        truth_w_all[b, ti] / self.masked_anchors[output_id][a, 0] + 1e-16)
                    target[b, a, j, i, 3] = np.log(
                        truth_h_all[b, ti] / self.masked_anchors[output_id][a, 1] + 1e-16)
                    target[b, a, j, i, 4] = 1
                    target[b, a, j, i, 5 + int(labels[b, ti, 4])] = 1
                    tgt_scale[b, a, j, i, :] = np.sqrt(
                        2 - truth_w_all[b, ti] * truth_h_all[b, ti] / fsize / fsize)
        return obj_mask, tgt_mask, tgt_scale, target

    def forward(self, xin, labels):
        labels_np = np.asarray(labels, dtype=np.float32)
        n_ch = 5 + self.n_classes
        A = self.n_anchors

        # Stage 1: launch decode for every head BEFORE the first host sync so
        # the three decode kernels and D2H transfers overlap.
        staged = []
        for output_id, output in enumerate(xin):
            B = output.shape[0]
            fsize = output.shape[2]
            S = fsize * fsize
            Sp = _round_up(S, _LANE_TILE)

            # NCHW -> (B, A, n_ch, S), zero-pad the lane axis to Sp
            x = jnp.reshape(jnp.asarray(output, dtype=jnp.float32), (B, A, n_ch, S))
            x = jnp.pad(x, ((0, 0), (0, 0), (0, 0), (0, Sp - S)))

            anchors = tuple(tuple(float(v) for v in row)
                            for row in self.masked_anchors[output_id])
            pred = _decode_head(x, self._grid_xy(fsize, Sp),
                                anchors=anchors, lane_tile=_LANE_TILE)
            staged.append((output_id, B, fsize, S, Sp, x, pred))

        # Single batched device->host sync for all heads' pred tensors.
        preds_np = jax.device_get([s[6] for s in staged])

        loss_xy = loss_wh = loss_obj = loss_cls = loss_l2 = jnp.float32(0.0)
        for (output_id, B, fsize, S, Sp, x, _), pred_np in zip(staged, preds_np):
            pred_boxes = np.asarray(pred_np)[:, :, :4, :S].reshape(
                B, A, 4, fsize, fsize).transpose(0, 1, 3, 4, 2)

            obj_mask, tgt_mask, tgt_scale, target = self.build_target(
                pred_boxes, labels_np, B, fsize, n_ch, output_id)

            # Explicitly zero-padded device-side operands (padded positions
            # contribute exactly zero to every loss term).
            target_k = np.zeros((B, A, n_ch, Sp), np.float32)
            target_k[:, :, :, :S] = target.transpose(0, 1, 4, 2, 3).reshape(B, A, n_ch, S)
            obj_k = np.zeros((B, A, 1, Sp), np.float32)
            obj_k[:, :, 0, :S] = obj_mask.reshape(B, A, S)
            tm_k = np.zeros((B, A, 1, Sp), np.float32)
            tm_k[:, :, 0, :S] = tgt_mask[..., 0].reshape(B, A, S)
            ts_k = np.zeros((B, A, 1, Sp), np.float32)
            ts_k[:, :, 0, :S] = tgt_scale[..., 0].reshape(B, A, S)

            lxy, lwh, lobj, lcls, ll2 = _head_losses(
                x, jnp.asarray(target_k), jnp.asarray(obj_k),
                jnp.asarray(tm_k), jnp.asarray(ts_k), lane_tile=_LANE_TILE)
            loss_xy = loss_xy + lxy
            loss_wh = loss_wh + lwh
            loss_obj = loss_obj + lobj
            loss_cls = loss_cls + lcls
            loss_l2 = loss_l2 + ll2

        loss = loss_xy + loss_wh + loss_obj + loss_cls
        return loss, loss_xy, loss_wh, loss_obj, loss_cls, loss_l2


# ----------------------------------- main -----------------------------------

if __name__ == "__main__":
    key = jax.random.PRNGKey(0)
    batch = 2
    n_classes = 8          # small, consistent with module structure (default 80)
    image_size = 64        # small image so fsizes are 8 / 4 / 2
    n_ch = 5 + n_classes

    mod = YoloLossPallas(n_classes=n_classes, n_anchors=3,
                         batch=batch, image_size=image_size)

    xin = []
    for stride in mod.strides:
        f = image_size // stride
        key, sub = jax.random.split(key)
        xin.append(0.5 * jax.random.normal(sub, (batch, 3 * n_ch, f, f),
                                           dtype=jnp.float32))

    # deterministic labels: [x1, y1, x2, y2, class], zero-padded rows at the end
    labels = np.zeros((batch, 4, 5), dtype=np.float32)
    labels[0, 0] = [10.0, 12.0, 30.0, 40.0, 2.0]
    labels[0, 1] = [2.0, 3.0, 20.0, 18.0, 5.0]
    labels[1, 0] = [5.0, 8.0, 50.0, 56.0, 1.0]

    result = mod.forward(xin, labels)
    result = jax.block_until_ready(result)
    print("KERNEL_OK")
</pallas_src>

<mosaic_0001>
module attributes {stable_mosaic.version = 11 : i64} {
  func.func @_decode_kernel(%arg0: i32, %arg1: memref<2x3x8x512xf32, #tpu.memory_space<vmem>>, %arg2: memref<2x512xf32, #tpu.memory_space<vmem>>, %arg3: memref<2x3x8x512xf32, #tpu.memory_space<vmem>>) attributes {dimension_semantics = [#tpu.dimension_semantics<parallel>], iteration_bounds = array<i64: 1>, scalar_prefetch = 0 : i64, scratch_operands = 0 : i64, tpu.core_type = #tpu.core_type<tc>, window_params = [{transform_indices = @transform_0, window_bounds = array<i64: 2, 3, 8, 512>}, {transform_indices = @transform_1, window_bounds = array<i64: 2, 512>}, {transform_indices = @transform_2, window_bounds = array<i64: 2, 3, 8, 512>}]} {
    %c0 = arith.constant 0 : index
    %c0_0 = arith.constant 0 : index
    %c0_1 = arith.constant 0 : index
    %c0_2 = arith.constant 0 : index
    %0 = vector.load %arg1[%c0, %c0_0, %c0_1, %c0_2] : memref<2x3x8x512xf32, #tpu.memory_space<vmem>>, vector<2x3x8x512xf32>
    %c0_3 = arith.constant 0 : index
    %c0_4 = arith.constant 0 : index
    %1 = vector.load %arg2[%c0_3, %c0_4] : memref<2x512xf32, #tpu.memory_space<vmem>>, vector<2x512xf32>
    %2 = vector.extract_strided_slice %1 {offsets = [0, 0], sizes = [1, 512], strides = [1, 1]} : vector<2x512xf32> to vector<1x512xf32>
    %3 = vector.extract_strided_slice %1 {offsets = [1, 0], sizes = [1, 512], strides = [1, 1]} : vector<2x512xf32> to vector<1x512xf32>
    %4 = tpu.iota {dimensions = array<i32: 1>} : vector<2x3x8x512xi32>
    %c0_i32 = arith.constant 0 : i32
    %5 = vector.broadcast %c0_i32 : i32 to vector<2x3x8x512xi32>
    %6 = arith.cmpi eq, %4, %5 : vector<2x3x8x512xi32>
    %cst = arith.constant 1.500000e+00 : f32
    %cst_5 = arith.constant 5.000000e+00 : f32
    %7 = vector.broadcast %cst : f32 to vector<2x3x8x512xf32>
    %8 = vector.broadcast %cst_5 : f32 to vector<2x3x8x512xf32>
    %9 = arith.select %6, %7, %8 : vector<2x3x8x512xi1>, vector<2x3x8x512xf32>
    %c0_i32_6 = arith.constant 0 : i32
    %10 = vector.broadcast %c0_i32_6 : i32 to vector<2x3x8x512xi32>
    %11 = arith.cmpi eq, %4, %10 : vector<2x3x8x512xi32>
    %cst_7 = arith.constant 2.000000e+00 : f32
    %cst_8 = arith.constant 3.500000e+00 : f32
    %12 = vector.broadcast %cst_7 : f32 to vector<2x3x8x512xf32>
    %13 = vector.broadcast %cst_8 : f32 to vector<2x3x8x512xf32>
    %14 = arith.select %11, %12, %13 : vector<2x3x8x512xi1>, vector<2x3x8x512xf32>
    %c1_i32 = arith.constant 1 : i32
    %15 = vector.broadcast %c1_i32 : i32 to vector<2x3x8x512xi32>
    %16 = arith.cmpi eq, %4, %15 : vector<2x3x8x512xi32>
    %cst_9 = arith.constant 2.375000e+00 : f32
    %17 = vector.broadcast %cst_9 : f32 to vector<2x3x8x512xf32>
    %18 = arith.select %16, %17, %9 : vector<2x3x8x512xi1>, vector<2x3x8x512xf32>
    %c1_i32_10 = arith.constant 1 : i32
    %19 = vector.broadcast %c1_i32_10 : i32 to vector<2x3x8x512xi32>
    %20 = arith.cmpi eq, %4, %19 : vector<2x3x8x512xi32>
    %cst_11 = arith.constant 4.500000e+00 : f32
    %21 = vector.broadcast %cst_11 : f32 to vector<2x3x8x512xf32>
    %22 = arith.select %20, %21, %14 : vector<2x3x8x512xi1>, vector<2x3x8x512xf32>
    %cst_12 = arith.constant 0.000000e+00 : f32
    %23 = vector.broadcast %cst_12 : f32 to vector<2x3x8x512xf32>
    %24 = arith.subf %23, %0 : vector<2x3x8x512xf32>
    %25 = math.exp %24 : vector<2x3x8x512xf32>
    %cst_13 = arith.constant 1.000000e+00 : f32
    %26 = vector.broadcast %cst_13 : f32 to vector<2x3x8x512xf32>
    %27 = arith.addf %26, %25 : vector<2x3x8x512xf32>
    %cst_14 = arith.constant 1.000000e+00 : f32
    %28 = vector.broadcast %cst_14 : f32 to vector<2x3x8x512xf32>
    %29 = arith.divf %28, %27 : vector<2x3x8x512xf32>
    %30 = math.exp %0 : vector<2x3x8x512xf32>
    %31 = tpu.iota {dimensions = array<i32: 2>} : vector<2x3x8x512xi32>
    %c0_i32_15 = arith.constant 0 : i32
    %32 = vector.broadcast %c0_i32_15 : i32 to vector<2x3x8x512xi32>
    %33 = arith.cmpi eq, %31, %32 : vector<2x3x8x512xi32>
    %34 = vector.shape_cast %2 : vector<1x512xf32> to vector<1x1x1x512xf32>
    %35 = vector.broadcast %34 : vector<1x1x1x512xf32> to vector<2x3x8x512xf32>
    %36 = arith.addf %29, %35 : vector<2x3x8x512xf32>
    %c1_i32_16 = arith.constant 1 : i32
    %37 = vector.broadcast %c1_i32_16 : i32 to vector<2x3x8x512xi32>
    %38 = arith.cmpi eq, %31, %37 : vector<2x3x8x512xi32>
    %39 = vector.shape_cast %3 : vector<1x512xf32> to vector<1x1x1x512xf32>
    %40 = vector.broadcast %39 : vector<1x1x1x512xf32> to vector<2x3x8x512xf32>
    %41 = arith.addf %29, %40 : vector<2x3x8x512xf32>
    %c2_i32 = arith.constant 2 : i32
    %42 = vector.broadcast %c2_i32 : i32 to vector<2x3x8x512xi32>
    %43 = arith.cmpi eq, %31, %42 : vector<2x3x8x512xi32>
    %44 = arith.mulf %30, %18 : vector<2x3x8x512xf32>
    %45 = arith.mulf %30, %22 : vector<2x3x8x512xf32>
    %46 = arith.select %43, %44, %45 : vector<2x3x8x512xi1>, vector<2x3x8x512xf32>
    %47 = arith.select %38, %41, %46 : vector<2x3x8x512xi1>, vector<2x3x8x512xf32>
    %48 = arith.select %33, %36, %47 : vector<2x3x8x512xi1>, vector<2x3x8x512xf32>
    %c0_17 = arith.constant 0 : index
    %c0_18 = arith.constant 0 : index
    %c0_19 = arith.constant 0 : index
    %c0_20 = arith.constant 0 : index
    %49 = vector.load %arg3[%c0_17, %c0_18, %c0_19, %c0_20] : memref<2x3x8x512xf32, #tpu.memory_space<vmem>>, vector<2x3x8x512xf32>
    tpu.vector_store %arg3[%c0_17, %c0_18, %c0_19, %c0_20], %48 {strides = array<i32>} : memref<2x3x8x512xf32, #tpu.memory_space<vmem>>, vector<2x3x8x512xf32>,
    return
  }
  func.func @transform_0(%arg0: i32) -> (i32, i32, i32, i32) {
    %c0_i32 = arith.constant 0 : i32
    %c0_i32_0 = arith.constant 0 : i32
    %c0_i32_1 = arith.constant 0 : i32
    %c0_i32_2 = arith.constant 0 : i32
    return %c0_i32, %c0_i32_0, %c0_i32_1, %arg0 : i32, i32, i32, i32
  }
  func.func @transform_1(%arg0: i32) -> (i32, i32) {
    %c0_i32 = arith.constant 0 : i32
    %c0_i32_0 = arith.constant 0 : i32
    return %c0_i32, %arg0 : i32, i32
  }
  func.func @transform_2(%arg0: i32) -> (i32, i32, i32, i32) {
    %c0_i32 = arith.constant 0 : i32
    %c0_i32_0 = arith.constant 0 : i32
    %c0_i32_1 = arith.constant 0 : i32
    %c0_i32_2 = arith.constant 0 : i32
    return %c0_i32, %c0_i32_0, %c0_i32_1, %arg0 : i32, i32, i32, i32
  }
}

</mosaic_0001>

<llo_original>
// kernel: _decode_head.1
$region0: #{_decode_head.1}
  #allocation0 [shape = 'u32[]', space=smem, size = 0x4, offset = 0x4, fixed_abs, tag = 'smem constant byte address 0x4 - core index']
  #allocation1 [shape = 'u32[72,128]{1,0:T(1,128)}', space=vmem, size = 0x9000, scoped, tag = 'internal scratch']
  %s0 = inlined_call_operand.vmem [shape: f32[2,3,13,512], index: 0, kind: input, shape index: {}]
  %s1 = inlined_call_operand.vmem [shape: f32[2,512], index: 1, kind: input, shape index: {}]
  %s2 = inlined_call_operand.hbm [shape: f32[2,3,8,512], index: 2, kind: output, shape index: {}]
  %s3 = sld [smem:[#allocation0]]
  $region41: #{_decode_head.1} parent=0
    _
  %s5 = ssub.s32 1, %s3
  %s6 = scalar_select 0, %s5, %s3
  $region1: #{_decode_head.1} parent=0
    #allocation2 [shape = 'u8[98304]{0}', space=vmem, size = 0x18000, scoped, tag = 'input window, operand 0, single buffered']
    #allocation3 [shape = 'u8[98304]{0}', space=vmem, size = 0x18000, scoped, tag = 'output window, operand 0, single buffered']
    #allocation4 [shape = 's32[1]{0}', space=sflag, size = 0x4, scoped, tag = 'scoped memory for _decode_head.1']
    %7 = vsyncpa [#allocation4], 0
    // Predicated region
    $region2: #{_decode_head.1} parent=1 // pred_check
      _
    $region3: #{_decode_head.1} parent=1 // pred_check_branch
      %9 = sbr.rel (0) target = $region5
    $region4: #{_decode_head.1} parent=1 // pred_region
      // Predicated region
      $region6: #{_decode_head.1} parent=4 // pred_check
        _
      $region7: #{_decode_head.1} parent=4 // pred_check_branch
        %11 = sbr.rel (0) target = $region9
      $region8: #{_decode_head.1} parent=4 // pred_region
        // Predicated region
        $region10: #{_decode_head.1} parent=8 // pred_check
          _
        $region11: #{_decode_head.1} parent=8 // pred_check_branch
          %13 = sbr.rel (0) target = $region13
        $region12: #{_decode_head.1} parent=8 // pred_region
          loop: start=0, step=1, limit=1
          $region14: #{_decode_head.1} parent=12 // loop_pre_header
            _
          $region15: #{_decode_head.1} parent=12 // loop_header
            %s15 = sphi 0, %s19
            %p16 = scmp.ge.s32.totalorder %s15, 1
            %s20 = sphi %s0, %s0
            %s21 = sphi [#allocation2], [#allocation2]
          $region16: #{_decode_head.1} parent=12 // loop_header_branch
            %18 = sbr.rel (%p16) target = $region20
          $region17: #{_decode_head.1} parent=12 // loop_body
            %v22 = vld [vmem:[%s20] sm:$0xff]
            %23 = vst [vmem:[%s21] sm:$0xff] %v22
            %v24 = vld [vmem:[%s20 + $0x8] sm:$0xff]
            %25 = vst [vmem:[%s21 + $0x8] sm:$0xff] %v24
            %v26 = vld [vmem:[%s20 + $0x10] sm:$0xff]
            %27 = vst [vmem:[%s21 + $0x10] sm:$0xff] %v26
            %v28 = vld [vmem:[%s20 + $0x18] sm:$0xff]
            %29 = vst [vmem:[%s21 + $0x18] sm:$0xff] %v28
            %v30 = vld [vmem:[%s20 + $0x40] sm:$0xff]
            %31 = vst [vmem:[%s21 + $0x20] sm:$0xff] %v30
            %v32 = vld [vmem:[%s20 + $0x48] sm:$0xff]
            %33 = vst [vmem:[%s21 + $0x28] sm:$0xff] %v32
            %v34 = vld [vmem:[%s20 + $0x50] sm:$0xff]
            %35 = vst [vmem:[%s21 + $0x30] sm:$0xff] %v34
            %v36 = vld [vmem:[%s20 + $0x58] sm:$0xff]
            %37 = vst [vmem:[%s21 + $0x38] sm:$0xff] %v36
            %v38 = vld [vmem:[%s20 + $0x80] sm:$0xff]
            %39 = vst [vmem:[%s21 + $0x40] sm:$0xff] %v38
            %v40 = vld [vmem:[%s20 + $0x88] sm:$0xff]
            %41 = vst [vmem:[%s21 + $0x48] sm:$0xff] %v40
            %v42 = vld [vmem:[%s20 + $0x90] sm:$0xff]
            %43 = vst [vmem:[%s21 + $0x50] sm:$0xff] %v42
            %v44 = vld [vmem:[%s20 + $0x98] sm:$0xff]
            %45 = vst [vmem:[%s21 + $0x58] sm:$0xff] %v44
            %v46 = vld [vmem:[%s20 + $0xc0] sm:$0xff]
            %47 = vst [vmem:[%s21 + $0x60] sm:$0xff] %v46
            %v48 = vld [vmem:[%s20 + $0xc8] sm:$0xff]
            %49 = vst [vmem:[%s21 + $0x68] sm:$0xff] %v48
            %v50 = vld [vmem:[%s20 + $0xd0] sm:$0xff]
            %51 = vst [vmem:[%s21 + $0x70] sm:$0xff] %v50
            %v52 = vld [vmem:[%s20 + $0xd8] sm:$0xff]
            %53 = vst [vmem:[%s21 + $0x78] sm:$0xff] %v52
            %v54 = vld [vmem:[%s20 + $0x100] sm:$0xff]
            %55 = vst [vmem:[%s21 + $0x80] sm:$0xff] %v54
            %v56 = vld [vmem:[%s20 + $0x108] sm:$0xff]
            %57 = vst [vmem:[%s21 + $0x88] sm:$0xff] %v56
            %v58 = vld [vmem:[%s20 + $0x110] sm:$0xff]
            %59 = vst [vmem:[%s21 + $0x90] sm:$0xff] %v58
            %v60 = vld [vmem:[%s20 + $0x118] sm:$0xff]
            %61 = vst [vmem:[%s21 + $0x98] sm:$0xff] %v60
            %v62 = vld [vmem:[%s20 + $0x140] sm:$0xff]
            %63 = vst [vmem:[%s21 + $0xa0] sm:$0xff] %v62
            %v64 = vld [vmem:[%s20 + $0x148] sm:$0xff]
            %65 = vst [vmem:[%s21 + $0xa8] sm:$0xff] %v64
            %v66 = vld [vmem:[%s20 + $0x150] sm:$0xff]
            %67 = vst [vmem:[%s21 + $0xb0] sm:$0xff] %v66
            %v68 = vld [vmem:[%s20 + $0x158] sm:$0xff]
            %69 = vst [vmem:[%s21 + $0xb8] sm:$0xff] %v68
          $region18: #{_decode_head.1} parent=12 // loop_footer
            %s19 = sadd.s32 1, %s15
          $region19: #{_decode_head.1} parent=12 // loop_footer_branch
            %14 = sbr.rel target = $region15
          $region20: #{_decode_head.1} parent=12 // loop_exit
            _
        $region13: #{_decode_head.1} parent=8 // pred_fallthru
          _
        // Predicated region
        $region21: #{_decode_head.1} parent=8 // pred_check
          _
        $region22: #{_decode_head.1} parent=8 // pred_check_branch
          %71 = sbr.rel target = $region24
        $region23: #{_decode_head.1} parent=8 // pred_region
          _
        $region24: #{_decode_head.1} parent=8 // pred_fallthru
          _
      $region9: #{_decode_head.1} parent=4 // pred_fallthru
        _
      %72 = vnop
    $region5: #{_decode_head.1} parent=1 // pred_fallthru
      _
    // Predicated region
    $region25: #{_decode_head.1} parent=1 // pred_check
      _
    $region26: #{_decode_head.1} parent=1 // pred_check_branch
      %74 = sbr.rel (0) target = $region28
    $region27: #{_decode_head.1} parent=1 // pred_region
      _
    $region28: #{_decode_head.1} parent=1 // pred_fallthru
      _
    // Predicated region
    $region29: #{_decode_head.1} parent=1 // pred_check
      _
    $region30: #{_decode_head.1} parent=1 // pred_check_branch
      %76 = sbr.rel (0) target = $region32
    $region31: #{_decode_head.1} parent=1 // pred_region
      _
    $region32: #{_decode_head.1} parent=1 // pred_fallthru
      _
    %v77 = vld [vmem:[#allocation2] sm:$0xff]
    %v78 = vld [vmem:[#allocation2 + $0x8] sm:$0xff]
    %v79 = vld [vmem:[#allocation2 + $0x10] sm:$0xff]
    %v80 = vld [vmem:[#allocation2 + $0x18] sm:$0xff]
    %v81 = vld [vmem:[#allocation2 + $0x20] sm:$0xff]
    %v82 = vld [vmem:[#allocation2 + $0x28] sm:$0xff]
    %v83 = vld [vmem:[#allocation2 + $0x30] sm:$0xff]
    %v84 = vld [vmem:[#allocation2 + $0x38] sm:$0xff]
    %v85 = vld [vmem:[#allocation2 + $0x40] sm:$0xff]
    %v86 = vld [vmem:[#allocation2 + $0x48] sm:$0xff]
    %v87 = vld [vmem:[#allocation2 + $0x50] sm:$0xff]
    %v88 = vld [vmem:[#allocation2 + $0x58] sm:$0xff]
    %v89 = vld [vmem:[#allocation2 + $0x60] sm:$0xff]
    %v90 = vld [vmem:[#allocation2 + $0x68] sm:$0xff]
    %v91 = vld [vmem:[#allocation2 + $0x70] sm:$0xff]
    %v92 = vld [vmem:[#allocation2 + $0x78] sm:$0xff]
    %v93 = vld [vmem:[#allocation2 + $0x80] sm:$0xff]
    %v94 = vld [vmem:[#allocation2 + $0x88] sm:$0xff]
    %v95 = vld [vmem:[#allocation2 + $0x90] sm:$0xff]
    %v96 = vld [vmem:[#allocation2 + $0x98] sm:$0xff]
    %v97 = vld [vmem:[#allocation2 + $0xa0] sm:$0xff]
    %v98 = vld [vmem:[#allocation2 + $0xa8] sm:$0xff]
    %v99 = vld [vmem:[#allocation2 + $0xb0] sm:$0xff]
    %v100 = vld [vmem:[#allocation2 + $0xb8] sm:$0xff]
    %v101 = vld [vmem:[%s1] sm:$0xff]
    %v102 = vsub.f32 0.0, %v77
    %v103 = vsub.f32 0.0, %v78
    %v104 = vsub.f32 0.0, %v79
    %v105 = vsub.f32 0.0, %v80
    %v106 = vsub.f32 0.0, %v81
    %v107 = vsub.f32 0.0, %v82
    %v108 = vsub.f32 0.0, %v83
    %v109 = vsub.f32 0.0, %v84
    %v110 = vsub.f32 0.0, %v85
    %v111 = vsub.f32 0.0, %v86
    %v112 = vsub.f32 0.0, %v87
    %v113 = vsub.f32 0.0, %v88
    %v114 = vsub.f32 0.0, %v89
    %v115 = vsub.f32 0.0, %v90
    %v116 = vsub.f32 0.0, %v91
    %v117 = vsub.f32 0.0, %v92
    %v118 = vsub.f32 0.0, %v93
    %v119 = vsub.f32 0.0, %v94
    %v120 = vsub.f32 0.0, %v95
    %v121 = vsub.f32 0.0, %v96
    %v122 = vsub.f32 0.0, %v97
    %v123 = vsub.f32 0.0, %v98
    %v124 = vsub.f32 0.0, %v99
    %v125 = vsub.f32 0.0, %v100
    %v126 = vmul.f32 %v102, 1.442695
    %v127 = vpow.pop %v126
    %v128 = vmul.f32 %v103, 1.442695
    %v129 = vpow.pop %v128
    %v130 = vmul.f32 %v104, 1.442695
    %v131 = vpow.pop %v130
    %v132 = vmul.f32 %v105, 1.442695
    %v133 = vpow.pop %v132
    %v134 = vmul.f32 %v106, 1.442695
    %v135 = vpow.pop %v134
    %v136 = vmul.f32 %v107, 1.442695
    %v137 = vpow.pop %v136
    %v138 = vmul.f32 %v108, 1.442695
    %v139 = vpow.pop %v138
    %v140 = vmul.f32 %v109, 1.442695
    %v141 = vpow.pop %v140
    %v142 = vmul.f32 %v110, 1.442695
    %v143 = vpow.pop %v142
    %v144 = vmul.f32 %v111, 1.442695
    %v145 = vpow.pop %v144
    %v146 = vmul.f32 %v112, 1.442695
    %v147 = vpow.pop %v146
    %v148 = vmul.f32 %v113, 1.442695
    %v149 = vpow.pop %v148
    %v150 = vmul.f32 %v114, 1.442695
    %v151 = vpow.pop %v150
    %v152 = vmul.f32 %v115, 1.442695
    %v153 = vpow.pop %v152
    %v154 = vmul.f32 %v116, 1.442695
    %v155 = vpow.pop %v154
    %v156 = vmul.f32 %v117, 1.442695
    %v157 = vpow.pop %v156
    %v158 = vmul.f32 %v118, 1.442695
    %v159 = vpow.pop %v158
    %v160 = vmul.f32 %v119, 1.442695
    %v161 = vpow.pop %v160
    %v162 = vmul.f32 %v120, 1.442695
    %v163 = vpow.pop %v162
    %v164 = vmul.f32 %v121, 1.442695
    %v165 = vpow.pop %v164
    %v166 = vmul.f32 %v122, 1.442695
    %v167 = vpow.pop %v166
    %v168 = vmul.f32 %v123, 1.442695
    %v169 = vpow.pop %v168
    %v170 = vmul.f32 %v124, 1.442695
    %v171 = vpow.pop %v170
    %v172 = vmul.f32 %v125, 1.442695
    %v173 = vpow.pop %v172
    %v174 = vadd.f32 %v127, 1.0
    %v175 = vadd.f32 %v129, 1.0
    %v176 = vadd.f32 %v131, 1.0
    %v177 = vadd.f32 %v133, 1.0
    %v178 = vadd.f32 %v135, 1.0
    %v179 = vadd.f32 %v137, 1.0
    %v180 = vadd.f32 %v139, 1.0
    %v181 = vadd.f32 %v141, 1.0
    %v182 = vadd.f32 %v143, 1.0
    %v183 = vadd.f32 %v145, 1.0
    %v184 = vadd.f32 %v147, 1.0
    %v185 = vadd.f32 %v149, 1.0
    %v186 = vadd.f32 %v151, 1.0
    %v187 = vadd.f32 %v153, 1.0
    %v188 = vadd.f32 %v155, 1.0
    %v189 = vadd.f32 %v157, 1.0
    %v190 = vadd.f32 %v159, 1.0
    %v191 = vadd.f32 %v161, 1.0
    %v192 = vadd.f32 %v163, 1.0
    %v193 = vadd.f32 %v165, 1.0
    %v194 = vadd.f32 %v167, 1.0
    %v195 = vadd.f32 %v169, 1.0
    %v196 = vadd.f32 %v171, 1.0
    %v197 = vadd.f32 %v173, 1.0
    %v198 = vrcp.pop %v174
    %v199 = vmul.f32 %v174, %v198
    %v200 = vsub.f32 1.0, %v199
    %v201 = vmul.f32 %v198, %v200
    %v202 = vadd.f32 %v198, %v201
    %vm203 = vweird.f32 %v174
    %vm204 = vweird.f32 %v198
    %vm205 = vmor %vm203, %vm204
    %v206 = vsel %vm205, %v198, %v202
    %v207 = vand.u32 2147483647, %v174
    %vm208 = vcmp.eq.f32.partialorder %v207, 8.507059e+37
    %v209 = vand.u32 %v174, 2147483648
    %v210 = vor.u32 1.1754944e-38, %v209
    %v211 = vsel %vm208, %v210, %v206
    %v212 = vmul.f32 1.0, %v211
    %v213 = vrcp.pop %v175
    %v214 = vmul.f32 %v175, %v213
    %v215 = vsub.f32 1.0, %v214
    %v216 = vmul.f32 %v213, %v215
    %v217 = vadd.f32 %v213, %v216
    %vm218 = vweird.f32 %v175
    %vm219 = vweird.f32 %v213
    %vm220 = vmor %vm218, %vm219
    %v221 = vsel %vm220, %v213, %v217
    %v222 = vand.u32 2147483647, %v175
    %vm223 = vcmp.eq.f32.partialorder %v222, 8.507059e+37
    %v224 = vand.u32 %v175, 2147483648
    %v225 = vor.u32 1.1754944e-38, %v224
    %v226 = vsel %vm223, %v225, %v221
    %v227 = vmul.f32 1.0, %v226
    %v228 = vrcp.pop %v176
    %v229 = vmul.f32 %v176, %v228
    %v230 = vsub.f32 1.0, %v229
    %v231 = vmul.f32 %v228, %v230
    %v232 = vadd.f32 %v228, %v231
    %vm233 = vweird.f32 %v176
    %vm234 = vweird.f32 %v228
    %vm235 = vmor %vm233, %vm234
    %v236 = vsel %vm235, %v228, %v232
    %v237 = vand.u32 2147483647, %v176
    %vm238 = vcmp.eq.f32.partialorder %v237, 8.507059e+37
    %v239 = vand.u32 %v176, 2147483648
    %v240 = vor.u32 1.1754944e-38, %v239
    %v241 = vsel %vm238, %v240, %v236
    %v242 = vmul.f32 1.0, %v241
    %v243 = vrcp.pop %v177
    %v244 = vmul.f32 %v177, %v243
    %v245 = vsub.f32 1.0, %v244
    %v246 = vmul.f32 %v243, %v245
    %v247 = vadd.f32 %v243, %v246
    %vm248 = vweird.f32 %v177
    %vm249 = vweird.f32 %v243
    %vm250 = vmor %vm248, %vm249
    %v251 = vsel %vm250, %v243, %v247
    %v252 = vand.u32 2147483647, %v177
    %vm253 = vcmp.eq.f32.partialorder %v252, 8.507059e+37
    %v254 = vand.u32 %v177, 2147483648
    %v255 = vor.u32 1.1754944e-38, %v254
    %v256 = vsel %vm253, %v255, %v251
    %v257 = vmul.f32 1.0, %v256
    %v258 = vrcp.pop %v178
    %v259 = vmul.f32 %v178, %v258
    %v260 = vsub.f32 1.0, %v259
    %v261 = vmul.f32 %v258, %v260
    %v262 = vadd.f32 %v258, %v261
    %vm263 = vweird.f32 %v178
    %vm264 = vweird.f32 %v258
    %vm265 = vmor %vm263, %vm264
    %v266 = vsel %vm265, %v258, %v262
    %v267 = vand.u32 2147483647, %v178
    %vm268 = vcmp.eq.f32.partialorder %v267, 8.507059e+37
    %v269 = vand.u32 %v178, 2147483648
    %v270 = vor.u32 1.1754944e-38, %v269
    %v271 = vsel %vm268, %v270, %v266
    %v272 = vmul.f32 1.0, %v271
    %v273 = vrcp.pop %v179
    %v274 = vmul.f32 %v179, %v273
    %v275 = vsub.f32 1.0, %v274
    %v276 = vmul.f32 %v273, %v275
    %v277 = vadd.f32 %v273, %v276
    %vm278 = vweird.f32 %v179
    %vm279 = vweird.f32 %v273
    %vm280 = vmor %vm278, %vm279
    %v281 = vsel %vm280, %v273, %v277
    %v282 = vand.u32 2147483647, %v179
    %vm283 = vcmp.eq.f32.partialorder %v282, 8.507059e+37
    %v284 = vand.u32 %v179, 2147483648
    %v285 = vor.u32 1.1754944e-38, %v284
    %v286 = vsel %vm283, %v285, %v281
    %v287 = vmul.f32 1.0, %v286
    %v288 = vrcp.pop %v180
    %v289 = vmul.f32 %v180, %v288
    %v290 = vsub.f32 1.0, %v289
    %v291 = vmul.f32 %v288, %v290
    %v292 = vadd.f32 %v288, %v291
    %vm293 = vweird.f32 %v180
    %vm294 = vweird.f32 %v288
    %vm295 = vmor %vm293, %vm294
    %v296 = vsel %vm295, %v288, %v292
    %v297 = vand.u32 2147483647, %v180
    %vm298 = vcmp.eq.f32.partialorder %v297, 8.507059e+37
    %v299 = vand.u32 %v180, 2147483648
    %v300 = vor.u32 1.1754944e-38, %v299
    %v301 = vsel %vm298, %v300, %v296
    %v302 = vmul.f32 1.0, %v301
    %v303 = vrcp.pop %v181
    %v304 = vmul.f32 %v181, %v303
    %v305 = vsub.f32 1.0, %v304
    %v306 = vmul.f32 %v303, %v305
    %v307 = vadd.f32 %v303, %v306
    %vm308 = vweird.f32 %v181
    %vm309 = vweird.f32 %v303
    %vm310 = vmor %vm308, %vm309
    %v311 = vsel %vm310, %v303, %v307
    %v312 = vand.u32 2147483647, %v181
    %vm313 = vcmp.eq.f32.partialorder %v312, 8.507059e+37
    %v314 = vand.u32 %v181, 2147483648
    %v315 = vor.u32 1.1754944e-38, %v314
    %v316 = vsel %vm313, %v315, %v311
    %v317 = vmul.f32 1.0, %v316
    %v318 = vrcp.pop %v182
    %v319 = vmul.f32 %v182, %v318
    %v320 = vsub.f32 1.0, %v319
    %v321 = vmul.f32 %v318, %v320
    %v322 = vadd.f32 %v318, %v321
    %vm323 = vweird.f32 %v182
    %vm324 = vweird.f32 %v318
    %vm325 = vmor %vm323, %vm324
    %v326 = vsel %vm325, %v318, %v322
    %v327 = vand.u32 2147483647, %v182
    %vm328 = vcmp.eq.f32.partialorder %v327, 8.507059e+37
    %v329 = vand.u32 %v182, 2147483648
    %v330 = vor.u32 1.1754944e-38, %v329
    %v331 = vsel %vm328, %v330, %v326
    %v332 = vmul.f32 1.0, %v331
    %v333 = vrcp.pop %v183
    %v334 = vmul.f32 %v183, %v333
    %v335 = vsub.f32 1.0, %v334
    %v336 = vmul.f32 %v333, %v335
    %v337 = vadd.f32 %v333, %v336
    %vm338 = vweird.f32 %v183
    %vm339 = vweird.f32 %v333
    %vm340 = vmor %vm338, %vm339
    %v341 = vsel %vm340, %v333, %v337
    %v342 = vand.u32 2147483647, %v183
    %vm343 = vcmp.eq.f32.partialorder %v342, 8.507059e+37
    %v344 = vand.u32 %v183, 2147483648
    %v345 = vor.u32 1.1754944e-38, %v344
    %v346 = vsel %vm343, %v345, %v341
    %v347 = vmul.f32 1.0, %v346
    %v348 = vrcp.pop %v184
    %v349 = vmul.f32 %v184, %v348
    %v350 = vsub.f32 1.0, %v349
    %v351 = vmul.f32 %v348, %v350
    %v352 = vadd.f32 %v348, %v351
    %vm353 = vweird.f32 %v184
    %vm354 = vweird.f32 %v348
    %vm355 = vmor %vm353, %vm354
    %v356 = vsel %vm355, %v348, %v352
    %v357 = vand.u32 2147483647, %v184
    %vm358 = vcmp.eq.f32.partialorder %v357, 8.507059e+37
    %v359 = vand.u32 %v184, 2147483648
    %v360 = vor.u32 1.1754944e-38, %v359
    %v361 = vsel %vm358, %v360, %v356
    %v362 = vmul.f32 1.0, %v361
    %v363 = vrcp.pop %v185
    %v364 = vmul.f32 %v185, %v363
    %v365 = vsub.f32 1.0, %v364
    %v366 = vmul.f32 %v363, %v365
    %v367 = vadd.f32 %v363, %v366
    %vm368 = vweird.f32 %v185
    %vm369 = vweird.f32 %v363
    %vm370 = vmor %vm368, %vm369
    %v371 = vsel %vm370, %v363, %v367
    %v372 = vand.u32 2147483647, %v185
    %vm373 = vcmp.eq.f32.partialorder %v372, 8.507059e+37
    %v374 = vand.u32 %v185, 2147483648
    %v375 = vor.u32 1.1754944e-38, %v374
    %v376 = vsel %vm373, %v375, %v371
    %v377 = vmul.f32 1.0, %v376
    %v378 = vrcp.pop %v186
    %v379 = vmul.f32 %v186, %v378
    %v380 = vsub.f32 1.0, %v379
    %v381 = vmul.f32 %v378, %v380
    %v382 = vadd.f32 %v378, %v381
    %vm383 = vweird.f32 %v186
    %vm384 = vweird.f32 %v378
    %vm385 = vmor %vm383, %vm384
    %v386 = vsel %vm385, %v378, %v382
    %v387 = vand.u32 2147483647, %v186
    %vm388 = vcmp.eq.f32.partialorder %v387, 8.507059e+37
    %v389 = vand.u32 %v186, 2147483648
    %v390 = vor.u32 1.1754944e-38, %v389
    %v391 = vsel %vm388, %v390, %v386
    %v392 = vmul.f32 1.0, %v391
    %v393 = vrcp.pop %v187
    %v394 = vmul.f32 %v187, %v393
    %v395 = vsub.f32 1.0, %v394
    %v396 = vmul.f32 %v393, %v395
    %v397 = vadd.f32 %v393, %v396
    %vm398 = vweird.f32 %v187
    %vm399 = vweird.f32 %v393
    %vm400 = vmor %vm398, %vm399
    %v401 = vsel %vm400, %v393, %v397
    %v402 = vand.u32 2147483647, %v187
    %vm403 = vcmp.eq.f32.partialorder %v402, 8.507059e+37
    %v404 = vand.u32 %v187, 2147483648
    %v405 = vor.u32 1.1754944e-38, %v404
    %v406 = vsel %vm403, %v405, %v401
    %v407 = vmul.f32 1.0, %v406
    %v408 = vrcp.pop %v188
    %v409 = vmul.f32 %v188, %v408
    %v410 = vsub.f32 1.0, %v409
    %v411 = vmul.f32 %v408, %v410
    %v412 = vadd.f32 %v408, %v411
    %vm413 = vweird.f32 %v188
    %vm414 = vweird.f32 %v408
    %vm415 = vmor %vm413, %vm414
    %v416 = vsel %vm415, %v408, %v412
    %v417 = vand.u32 2147483647, %v188
    %vm418 = vcmp.eq.f32.partialorder %v417, 8.507059e+37
    %v419 = vand.u32 %v188, 2147483648
    %v420 = vor.u32 1.1754944e-38, %v419
    %v421 = vsel %vm418, %v420, %v416
    %v422 = vmul.f32 1.0, %v421
    %v423 = vrcp.pop %v189
    %v424 = vmul.f32 %v189, %v423
    %v425 = vsub.f32 1.0, %v424
    %v426 = vmul.f32 %v423, %v425
    %v427 = vadd.f32 %v423, %v426
    %vm428 = vweird.f32 %v189
    %vm429 = vweird.f32 %v423
    %vm430 = vmor %vm428, %vm429
    %v431 = vsel %vm430, %v423, %v427
    %v432 = vand.u32 2147483647, %v189
    %vm433 = vcmp.eq.f32.partialorder %v432, 8.507059e+37
    %v434 = vand.u32 %v189, 2147483648
    %v435 = vor.u32 1.1754944e-38, %v434
    %v436 = vsel %vm433, %v435, %v431
    %v437 = vmul.f32 1.0, %v436
    %v438 = vrcp.pop %v190
    %v439 = vmul.f32 %v190, %v438
    %v440 = vsub.f32 1.0, %v439
    %v441 = vmul.f32 %v438, %v440
    %v442 = vadd.f32 %v438, %v441
    %vm443 = vweird.f32 %v190
    %vm444 = vweird.f32 %v438
    %vm445 = vmor %vm443, %vm444
    %v446 = vsel %vm445, %v438, %v442
    %v447 = vand.u32 2147483647, %v190
    %vm448 = vcmp.eq.f32.partialorder %v447, 8.507059e+37
    %v449 = vand.u32 %v190, 2147483648
    %v450 = vor.u32 1.1754944e-38, %v449
    %v451 = vsel %vm448, %v450, %v446
    %v452 = vmul.f32 1.0, %v451
    %v453 = vrcp.pop %v191
    %v454 = vmul.f32 %v191, %v453
    %v455 = vsub.f32 1.0, %v454
    %v456 = vmul.f32 %v453, %v455
    %v457 = vadd.f32 %v453, %v456
    %vm458 = vweird.f32 %v191
    %vm459 = vweird.f32 %v453
    %vm460 = vmor %vm458, %vm459
    %v461 = vsel %vm460, %v453, %v457
    %v462 = vand.u32 2147483647, %v191
    %vm463 = vcmp.eq.f32.partialorder %v462, 8.507059e+37
    %v464 = vand.u32 %v191, 2147483648
    %v465 = vor.u32 1.1754944e-38, %v464
    %v466 = vsel %vm463, %v465, %v461
    %v467 = vmul.f32 1.0, %v466
    %v468 = vrcp.pop %v192
    %v469 = vmul.f32 %v192, %v468
    %v470 = vsub.f32 1.0, %v469
    %v471 = vmul.f32 %v468, %v470
    %v472 = vadd.f32 %v468, %v471
    %vm473 = vweird.f32 %v192
    %vm474 = vweird.f32 %v468
    %vm475 = vmor %vm473, %vm474
    %v476 = vsel %vm475, %v468, %v472
    %v477 = vand.u32 2147483647, %v192
    %vm478 = vcmp.eq.f32.partialorder %v477, 8.507059e+37
    %v479 = vand.u32 %v192, 2147483648
    %v480 = vor.u32 1.1754944e-38, %v479
    %v481 = vsel %vm478, %v480, %v476
    %v482 = vmul.f32 1.0, %v481
    %v483 = vrcp.pop %v193
    %v484 = vmul.f32 %v193, %v483
    %v485 = vsub.f32 1.0, %v484
    %v486 = vmul.f32 %v483, %v485
    %v487 = vadd.f32 %v483, %v486
    %vm488 = vweird.f32 %v193
    %vm489 = vweird.f32 %v483
    %vm490 = vmor %vm488, %vm489
    %v491 = vsel %vm490, %v483, %v487
    %v492 = vand.u32 2147483647, %v193
    %vm493 = vcmp.eq.f32.partialorder %v492, 8.507059e+37
    %v494 = vand.u32 %v193, 2147483648
    %v495 = vor.u32 1.1754944e-38, %v494
    %v496 = vsel %vm493, %v495, %v491
    %v497 = vmul.f32 1.0, %v496
    %v498 = vrcp.pop %v194
    %v499 = vmul.f32 %v194, %v498
    %v500 = vsub.f32 1.0, %v499
    %v501 = vmul.f32 %v498, %v500
    %v502 = vadd.f32 %v498, %v501
    %vm503 = vweird.f32 %v194
    %vm504 = vweird.f32 %v498
    %vm505 = vmor %vm503, %vm504
    %v506 = vsel %vm505, %v498, %v502
    %v507 = vand.u32 2147483647, %v194
    %vm508 = vcmp.eq.f32.partialorder %v507, 8.507059e+37
    %v509 = vand.u32 %v194, 2147483648
    %v510 = vor.u32 1.1754944e-38, %v509
    %v511 = vsel %vm508, %v510, %v506
    %v512 = vmul.f32 1.0, %v511
    %v513 = vrcp.pop %v195
    %v514 = vmul.f32 %v195, %v513
    %v515 = vsub.f32 1.0, %v514
    %v516 = vmul.f32 %v513, %v515
    %v517 = vadd.f32 %v513, %v516
    %vm518 = vweird.f32 %v195
    %vm519 = vweird.f32 %v513
    %vm520 = vmor %vm518, %vm519
    %v521 = vsel %vm520, %v513, %v517
    %v522 = vand.u32 2147483647, %v195
    %vm523 = vcmp.eq.f32.partialorder %v522, 8.507059e+37
    %v524 = vand.u32 %v195, 2147483648
    %v525 = vor.u32 1.1754944e-38, %v524
    %v526 = vsel %vm523, %v525, %v521
    %v527 = vmul.f32 1.0, %v526
    %v528 = vrcp.pop %v196
    %v529 = vmul.f32 %v196, %v528
    %v530 = vsub.f32 1.0, %v529
    %v531 = vmul.f32 %v528, %v530
    %v532 = vadd.f32 %v528, %v531
    %vm533 = vweird.f32 %v196
    %vm534 = vweird.f32 %v528
    %vm535 = vmor %vm533, %vm534
    %v536 = vsel %vm535, %v528, %v532
    %v537 = vand.u32 2147483647, %v196
    %vm538 = vcmp.eq.f32.partialorder %v537, 8.507059e+37
    %v539 = vand.u32 %v196, 2147483648
    %v540 = vor.u32 1.1754944e-38, %v539
    %v541 = vsel %vm538, %v540, %v536
    %v542 = vmul.f32 1.0, %v541
    %v543 = vrcp.pop %v197
    %v544 = vmul.f32 %v197, %v543
    %v545 = vsub.f32 1.0, %v544
    %v546 = vmul.f32 %v543, %v545
    %v547 = vadd.f32 %v543, %v546
    %vm548 = vweird.f32 %v197
    %vm549 = vweird.f32 %v543
    %vm550 = vmor %vm548, %vm549
    %v551 = vsel %vm550, %v543, %v547
    %v552 = vand.u32 2147483647, %v197
    %vm553 = vcmp.eq.f32.partialorder %v552, 8.507059e+37
    %v554 = vand.u32 %v197, 2147483648
    %v555 = vor.u32 1.1754944e-38, %v554
    %v556 = vsel %vm553, %v555, %v551
    %v557 = vmul.f32 1.0, %v556
    %v558 = vmul.f32 %v77, 1.442695
    %v559 = vpow.pop %v558
    %v560 = vmul.f32 %v78, 1.442695
    %v561 = vpow.pop %v560
    %v562 = vmul.f32 %v79, 1.442695
    %v563 = vpow.pop %v562
    %v564 = vmul.f32 %v80, 1.442695
    %v565 = vpow.pop %v564
    %v566 = vmul.f32 %v81, 1.442695
    %v567 = vpow.pop %v566
    %v568 = vmul.f32 %v82, 1.442695
    %v569 = vpow.pop %v568
    %v570 = vmul.f32 %v83, 1.442695
    %v571 = vpow.pop %v570
    %v572 = vmul.f32 %v84, 1.442695
    %v573 = vpow.pop %v572
    %v574 = vmul.f32 %v85, 1.442695
    %v575 = vpow.pop %v574
    %v576 = vmul.f32 %v86, 1.442695
    %v577 = vpow.pop %v576
    %v578 = vmul.f32 %v87, 1.442695
    %v579 = vpow.pop %v578
    %v580 = vmul.f32 %v88, 1.442695
    %v581 = vpow.pop %v580
    %v582 = vmul.f32 %v89, 1.442695
    %v583 = vpow.pop %v582
    %v584 = vmul.f32 %v90, 1.442695
    %v585 = vpow.pop %v584
    %v586 = vmul.f32 %v91, 1.442695
    %v587 = vpow.pop %v586
    %v588 = vmul.f32 %v92, 1.442695
    %v589 = vpow.pop %v588
    %v590 = vmul.f32 %v93, 1.442695
    %v591 = vpow.pop %v590
    %v592 = vmul.f32 %v94, 1.442695
    %v593 = vpow.pop %v592
    %v594 = vmul.f32 %v95, 1.442695
    %v595 = vpow.pop %v594
    %v596 = vmul.f32 %v96, 1.442695
    %v597 = vpow.pop %v596
    %v598 = vmul.f32 %v97, 1.442695
    %v599 = vpow.pop %v598
    %v600 = vmul.f32 %v98, 1.442695
    %v601 = vpow.pop %v600
    %v602 = vmul.f32 %v99, 1.442695
    %v603 = vpow.pop %v602
    %v604 = vmul.f32 %v100, 1.442695
    %v605 = vpow.pop %v604
    %v606 = vlaneseq
    %v607 = vshrl.u32 %v606, 7
    %vm608 = vcmp.eq.s32.totalorder %v607, 0
    %v610 = vperm.slane %v101, 0
    %v611 = vperm.slane %v101, 2
    %v612 = vperm.slane %v101, 4
    %v613 = vperm.slane %v101, 6
    %v618 = vperm.slane %v610, 0
    %v619 = vperm.slane %v611, 0
    %v620 = vperm.slane %v612, 0
    %v621 = vperm.slane %v613, 0
    %v622 = vadd.f32 %v212, %v618
    %v623 = vadd.f32 %v227, %v619
    %v624 = vadd.f32 %v242, %v620
    %v625 = vadd.f32 %v257, %v621
    %v626 = vadd.f32 %v272, %v618
    %v627 = vadd.f32 %v287, %v619
    %v628 = vadd.f32 %v302, %v620
    %v629 = vadd.f32 %v317, %v621
    %v630 = vadd.f32 %v332, %v618
    %v631 = vadd.f32 %v347, %v619
    %v632 = vadd.f32 %v362, %v620
    %v633 = vadd.f32 %v377, %v621
    %v634 = vadd.f32 %v392, %v618
    %v635 = vadd.f32 %v407, %v619
    %v636 = vadd.f32 %v422, %v620
    %v637 = vadd.f32 %v437, %v621
    %v638 = vadd.f32 %v452, %v618
    %v639 = vadd.f32 %v467, %v619
    %v640 = vadd.f32 %v482, %v620
    %v641 = vadd.f32 %v497, %v621
    %v642 = vadd.f32 %v512, %v618
    %v643 = vadd.f32 %v527, %v619
    %v644 = vadd.f32 %v542, %v620
    %v645 = vadd.f32 %v557, %v621
    %vm646 = vcmp.eq.s32.totalorder %v607, 1
    %v647 = vperm.slane %v101, 1
    %v648 = vperm.slane %v101, 3
    %v649 = vperm.slane %v101, 5
    %v650 = vperm.slane %v101, 7
    %v655 = vperm.slane %v647, 1
    %v656 = vperm.slane %v648, 1
    %v657 = vperm.slane %v649, 1
    %v658 = vperm.slane %v650, 1
    %v659 = vadd.f32 %v212, %v655
    %v660 = vadd.f32 %v227, %v656
    %v661 = vadd.f32 %v242, %v657
    %v662 = vadd.f32 %v257, %v658
    %v663 = vadd.f32 %v272, %v655
    %v664 = vadd.f32 %v287, %v656
    %v665 = vadd.f32 %v302, %v657
    %v666 = vadd.f32 %v317, %v658
    %v667 = vadd.f32 %v332, %v655
    %v668 = vadd.f32 %v347, %v656
    %v669 = vadd.f32 %v362, %v657
    %v670 = vadd.f32 %v377, %v658
    %v671 = vadd.f32 %v392, %v655
    %v672 = vadd.f32 %v407, %v656
    %v673 = vadd.f32 %v422, %v657
    %v674 = vadd.f32 %v437, %v658
    %v675 = vadd.f32 %v452, %v655
    %v676 = vadd.f32 %v467, %v656
    %v677 = vadd.f32 %v482, %v657
    %v678 = vadd.f32 %v497, %v658
    %v679 = vadd.f32 %v512, %v655
    %v680 = vadd.f32 %v527, %v656
    %v681 = vadd.f32 %v542, %v657
    %v682 = vadd.f32 %v557, %v658
    %vm683 = vcmp.eq.s32.totalorder %v607, 2
    %v684 = vmul.f32 %v559, 1.5
    %v685 = vmul.f32 %v561, 1.5
    %v686 = vmul.f32 %v563, 1.5
    %v687 = vmul.f32 %v565, 1.5
    %v688 = vmul.f32 %v567, 2.375
    %v689 = vmul.f32 %v569, 2.375
    %v690 = vmul.f32 %v571, 2.375
    %v691 = vmul.f32 %v573, 2.375
    %v692 = vmul.f32 %v575, 5.0
    %v693 = vmul.f32 %v577, 5.0
    %v694 = vmul.f32 %v579, 5.0
    %v695 = vmul.f32 %v581, 5.0
    %v696 = vmul.f32 %v583, 1.5
    %v697 = vmul.f32 %v585, 1.5
    %v698 = vmul.f32 %v587, 1.5
    %v699 = vmul.f32 %v589, 1.5
    %v700 = vmul.f32 %v591, 2.375
    %v701 = vmul.f32 %v593, 2.375
    %v702 = vmul.f32 %v595, 2.375
    %v703 = vmul.f32 %v597, 2.375
    %v704 = vmul.f32 %v599, 5.0
    %v705 = vmul.f32 %v601, 5.0
    %v706 = vmul.f32 %v603, 5.0
    %v707 = vmul.f32 %v605, 5.0
    %v708 = vmul.f32 %v559, 2.0
    %v709 = vmul.f32 %v561, 2.0
    %v710 = vmul.f32 %v563, 2.0
    %v711 = vmul.f32 %v565, 2.0
    %v712 = vmul.f32 %v567, 4.5
    %v713 = vmul.f32 %v569, 4.5
    %v714 = vmul.f32 %v571, 4.5
    %v715 = vmul.f32 %v573, 4.5
    %v716 = vmul.f32 %v575, 3.5
    %v717 = vmul.f32 %v577, 3.5
    %v718 = vmul.f32 %v579, 3.5
    %v719 = vmul.f32 %v581, 3.5
    %v720 = vmul.f32 %v583, 2.0
    %v721 = vmul.f32 %v585, 2.0
    %v722 = vmul.f32 %v587, 2.0
    %v723 = vmul.f32 %v589, 2.0
    %v724 = vmul.f32 %v591, 4.5
    %v725 = vmul.f32 %v593, 4.5
    %v726 = vmul.f32 %v595, 4.5
    %v727 = vmul.f32 %v597, 4.5
    %v728 = vmul.f32 %v599, 3.5
    %v729 = vmul.f32 %v601, 3.5
    %v730 = vmul.f32 %v603, 3.5
    %v731 = vmul.f32 %v605, 3.5
    %v732 = vsel %vm683, %v684, %v708
    %v733 = vsel %vm683, %v685, %v709
    %v734 = vsel %vm683, %v686, %v710
    %v735 = vsel %vm683, %v687, %v711
    %v736 = vsel %vm683, %v688, %v712
    %v737 = vsel %vm683, %v689, %v713
    %v738 = vsel %vm683, %v690, %v714
    %v739 = vsel %vm683, %v691, %v715
    %v740 = vsel %vm683, %v692, %v716
    %v741 = vsel %vm683, %v693, %v717
    %v742 = vsel %vm683, %v694, %v718
    %v743 = vsel %vm683, %v695, %v719
    %v744 = vsel %vm683, %v696, %v720
    %v745 = vsel %vm683, %v697, %v721
    %v746 = vsel %vm683, %v698, %v722
    %v747 = vsel %vm683, %v699, %v723
    %v748 = vsel %vm683, %v700, %v724
    %v749 = vsel %vm683, %v701, %v725
    %v750 = vsel %vm683, %v702, %v726
    %v751 = vsel %vm683, %v703, %v727
    %v752 = vsel %vm683, %v704, %v728
    %v753 = vsel %vm683, %v705, %v729
    %v754 = vsel %vm683, %v706, %v730
    %v755 = vsel %vm683, %v707, %v731
    %v756 = vsel %vm646, %v659, %v732
    %v757 = vsel %vm646, %v660, %v733
    %v758 = vsel %vm646, %v661, %v734
    %v759 = vsel %vm646, %v662, %v735
    %v760 = vsel %vm646, %v663, %v736
    %v761 = vsel %vm646, %v664, %v737
    %v762 = vsel %vm646, %v665, %v738
    %v763 = vsel %vm646, %v666, %v739
    %v764 = vsel %vm646, %v667, %v740
    %v765 = vsel %vm646, %v668, %v741
    %v766 = vsel %vm646, %v669, %v742
    %v767 = vsel %vm646, %v670, %v743
    %v768 = vsel %vm646, %v671, %v744
    %v769 = vsel %vm646, %v672, %v745
    %v770 = vsel %vm646, %v673, %v746
    %v771 = vsel %vm646, %v674, %v747
    %v772 = vsel %vm646, %v675, %v748
    %v773 = vsel %vm646, %v676, %v749
    %v774 = vsel %vm646, %v677, %v750
    %v775 = vsel %vm646, %v678, %v751
    %v776 = vsel %vm646, %v679, %v752
    %v777 = vsel %vm646, %v680, %v753
    %v778 = vsel %vm646, %v681, %v754
    %v779 = vsel %vm646, %v682, %v755
    %v780 = vsel %vm608, %v622, %v756
    %v781 = vsel %vm608, %v623, %v757
    %v782 = vsel %vm608, %v624, %v758
    %v783 = vsel %vm608, %v625, %v759
    %v784 = vsel %vm608, %v626, %v760
    %v785 = vsel %vm608, %v627, %v761
    %v786 = vsel %vm608, %v628, %v762
    %v787 = vsel %vm608, %v629, %v763
    %v788 = vsel %vm608, %v630, %v764
    %v789 = vsel %vm608, %v631, %v765
    %v790 = vsel %vm608, %v632, %v766
    %v791 = vsel %vm608, %v633, %v767
    %v792 = vsel %vm608, %v634, %v768
    %v793 = vsel %vm608, %v635, %v769
    %v794 = vsel %vm608, %v636, %v770
    %v795 = vsel %vm608, %v637, %v771
    %v796 = vsel %vm608, %v638, %v772
    %v797 = vsel %vm608, %v639, %v773
    %v798 = vsel %vm608, %v640, %v774
    %v799 = vsel %vm608, %v641, %v775
    %v800 = vsel %vm608, %v642, %v776
    %v801 = vsel %vm608, %v643, %v777
    %v802 = vsel %vm608, %v644, %v778
    %v803 = vsel %vm608, %v645, %v779
    %804 = vst [vmem:[#allocation3] sm:$0xff] %v780
    %805 = vst [vmem:[#allocation3 + $0x8] sm:$0xff] %v781
    %806 = vst [vmem:[#allocation3 + $0x10] sm:$0xff] %v782
    %807 = vst [vmem:[#allocation3 + $0x18] sm:$0xff] %v783
    %808 = vst [vmem:[#allocation3 + $0x20] sm:$0xff] %v784
    %809 = vst [vmem:[#allocation3 + $0x28] sm:$0xff] %v785
    %810 = vst [vmem:[#allocation3 + $0x30] sm:$0xff] %v786
    %811 = vst [vmem:[#allocation3 + $0x38] sm:$0xff] %v787
    %812 = vst [vmem:[#allocation3 + $0x40] sm:$0xff] %v788
    %813 = vst [vmem:[#allocation3 + $0x48] sm:$0xff] %v789
    %814 = vst [vmem:[#allocation3 + $0x50] sm:$0xff] %v790
    %815 = vst [vmem:[#allocation3 + $0x58] sm:$0xff] %v791
    %816 = vst [vmem:[#allocation3 + $0x60] sm:$0xff] %v792
    %817 = vst [vmem:[#allocation3 + $0x68] sm:$0xff] %v793
    %818 = vst [vmem:[#allocation3 + $0x70] sm:$0xff] %v794
    %819 = vst [vmem:[#allocation3 + $0x78] sm:$0xff] %v795
    %820 = vst [vmem:[#allocation3 + $0x80] sm:$0xff] %v796
    %821 = vst [vmem:[#allocation3 + $0x88] sm:$0xff] %v797
    %822 = vst [vmem:[#allocation3 + $0x90] sm:$0xff] %v798
    %823 = vst [vmem:[#allocation3 + $0x98] sm:$0xff] %v799
    %824 = vst [vmem:[#allocation3 + $0xa0] sm:$0xff] %v800
    %825 = vst [vmem:[#allocation3 + $0xa8] sm:$0xff] %v801
    %826 = vst [vmem:[#allocation3 + $0xb0] sm:$0xff] %v802
    %827 = vst [vmem:[#allocation3 + $0xb8] sm:$0xff] %v803
    // Predicated region
    $region33: #{_decode_head.1} parent=1 // pred_check
      _
    $region34: #{_decode_head.1} parent=1 // pred_check_branch
      %829 = sbr.rel (0) target = $region36
    $region35: #{_decode_head.1} parent=1 // pred_region
      %831 = vsyncadd [#allocation4], 0
      %s832 = sshll.u32 [#allocation3], 4
      %s833 = int_to_ptr.vmem [resolvable:$true] %s832
      %s834 = sshll.u32 %s2, 4
      %s835 = int_to_ptr.hbm [resolvable:$true] %s834
      %840 = dma.vmem_to_hbm [thread:$0]  %s833, 3072, %s835, [#allocation4], 512, 512, 32
    $region36: #{_decode_head.1} parent=1 // pred_fallthru
      _
    // Predicated region
    $region37: #{_decode_head.1} parent=1 // pred_check
      _
    $region38: #{_decode_head.1} parent=1 // pred_check_branch
      %842 = sbr.rel (0) target = $region40
    $region39: #{_decode_head.1} parent=1 // pred_region
      %844 = dma.done [#allocation4], 3072
    $region40: #{_decode_head.1} parent=1 // pred_fallthru
      _
    %845 = vsyncpa [#allocation4], 1

</llo_original>
